<compile_context>
chip_gen: v7x
topology: tpu7x:2x2x1
jax: 0.10.0
libtpu: 0.0.40
codegen_flags: <defaults>
</compile_context>

<pallas_src>
import functools

import jax
import jax.numpy as jnp
from jax import lax
from jax.experimental import pallas as pl
from jax.experimental.pallas import tpu as pltpu


def _round_up(v: int, m: int) -> int:
    return ((v + m - 1) // m) * m


def _cdiv(a: int, b: int) -> int:
    return (a + b - 1) // b


def _lora_linear_kernel(x_ref, w_ref, xa_ref, b_ref, bias_ref, o_ref, acc_ref,
                        *, precision):
    # x_ref:    (tm, tk)  activation tile
    # w_ref:    (tn, tk)  frozen W tile in native (out, in) layout (no host transpose)
    # xa_ref:   (tm, R)   hoisted LoRA down-projection x @ A (K-invariant)
    # b_ref:    (R, tn)   alpha-folded LoRA up-projection tile
    # bias_ref: (1, tn)   linear bias tile (f32)
    # o_ref:    (tm, tn)  output tile
    # acc_ref:  (tm, tn)  f32 accumulator scratch, resident across the K axis
    k = pl.program_id(2)
    nk = pl.num_programs(2)

    @pl.when(k == 0)
    def _():
        # The k==0 write happens anyway, so seeding with the bias is free and
        # removes a (tm, tn) VPU add from the epilogue.
        acc_ref[...] = jnp.broadcast_to(bias_ref[...], acc_ref.shape)

    # x (tm, tk) . W (tn, tk) contracted on K  ==  x @ W^T, no transposed weight.
    partial = lax.dot_general(
        x_ref[...], w_ref[...],
        dimension_numbers=(((1,), (1,)), ((), ())),
        preferred_element_type=jnp.float32,
        precision=precision,
    )

    @pl.when(k < nk - 1)
    def _():
        acc_ref[...] += partial

    @pl.when(k == nk - 1)
    def _():
        # Last K step: fold this step's partial product straight into the output
        # (saves one f32 acc store+reload), add the rank-R LoRA term, cast, store.
        lora = lax.dot_general(
            xa_ref[...], b_ref[...],
            dimension_numbers=(((1,), (0,)), ((), ())),
            preferred_element_type=jnp.float32,
            precision=precision,
        )
        o_ref[...] = (acc_ref[...] + partial + lora).astype(o_ref.dtype)


@functools.partial(jax.jit, static_argnames=("compute_dtype", "tm", "tn", "tk"))
def lora_linear_forward(x, W, bias, A, B, alpha=1.0, *,
                        compute_dtype=None, tm=512, tn=512, tk=1024):
    """x: (..., in_features) -> (..., out_features).

    Computes x @ W^T + bias + alpha * ((x @ A) @ B), matching the PyTorch
    LowRankLinearAdapter.forward (unmerged, rank > 0 path).
    Set compute_dtype=jnp.bfloat16 to run the MXU in bf16 (f32 accumulation).
    """
    *lead, K = x.shape
    N, K_w = W.shape
    assert K_w == K, "W must be (out_features, in_features)"
    R = A.shape[1]
    M = 1
    for d in lead:
        M *= int(d)

    out_dtype = x.dtype
    if compute_dtype is None:
        compute_dtype = x.dtype
    # f32 inputs: full-precision MXU passes so results match an f32 reference.
    # bf16 inputs: DEFAULT already is the native single-pass bf16 MXU mode.
    precision = (lax.Precision.HIGHEST
                 if jnp.dtype(compute_dtype) == jnp.dtype(jnp.float32)
                 else lax.Precision.DEFAULT)

    if bias is None:
        bias = jnp.zeros((N,), dtype=jnp.float32)

    # ---- Tile selection ---------------------------------------------------
    tm = min(tm, _round_up(M, 8))
    if tm <= 256:
        # Small-M / decode regime is W-DMA bound: grow K tiles to amortize the
        # per-grid-step overhead and keep the weight DMA pipeline full.
        tk = max(tk, 2048)
    tn = min(tn, _round_up(N, 128))
    tk = min(tk, _round_up(K, 128))

    # Keep >= 2 blocks on a parallel grid axis when possible so both v7x
    # TensorCores get sharded work (harmless on single-TC chips).
    if (_round_up(M, tm) // tm == 1) and (_round_up(N, tn) // tn == 1) and N > 128:
        tn = max(128, _round_up(_cdiv(N, 2), 128))

    Mp, Np, Kp = _round_up(M, tm), _round_up(N, tn), _round_up(K, tk)
    grid = (Mp // tm, Np // tn, Kp // tk)

    # ---- Host-side prep (no weight transpose) ------------------------------
    x2d = x.reshape(M, K)

    # Hoisted LoRA down-projection: rank-tiny, done once instead of per-N tile.
    xa = jnp.dot(x2d.astype(compute_dtype), A.astype(compute_dtype),
                 preferred_element_type=jnp.float32,
                 precision=precision).astype(compute_dtype)

    # Zero-padding keeps the math exact (padded rows/cols contribute zero).
    xp = jnp.pad(x2d.astype(compute_dtype), ((0, Mp - M), (0, Kp - K)))
    wp = jnp.pad(W.astype(compute_dtype), ((0, Np - N), (0, Kp - K)))  # native (N, K)
    xap = jnp.pad(xa, ((0, Mp - M), (0, 0)))
    bp = jnp.pad((alpha * B).astype(compute_dtype), ((0, 0), (0, Np - N)))
    biasp = jnp.pad(bias.astype(jnp.float32).reshape(1, N), ((0, 0), (0, Np - N)))

    # ---- VMEM budget / cost hint -------------------------------------------
    csize = jnp.dtype(compute_dtype).itemsize
    osize = jnp.dtype(out_dtype).itemsize
    vmem_bytes = (
        2 * (tm * tk + tn * tk + tm * R + R * tn) * csize   # double-buffered inputs
        + 2 * tn * 4                                        # bias (f32)
        + 2 * tm * tn * osize                               # double-buffered output
        + tm * tn * 4                                       # f32 accumulator scratch
    )
    vmem_limit = max(32 * 1024 * 1024,
                     min(int(vmem_bytes * 1.25) + (2 << 20), 100 * 1024 * 1024))

    cost = pl.CostEstimate(
        flops=2 * Mp * Np * Kp + 2 * Mp * R * Np,
        transcendentals=0,
        bytes_accessed=(Mp * Kp + Np * Kp + Mp * R + R * Np) * csize
        + Mp * Np * osize + Np * 4,
    )

    kernel = functools.partial(_lora_linear_kernel, precision=precision)
    out = pl.pallas_call(
        kernel,
        out_shape=jax.ShapeDtypeStruct((Mp, Np), out_dtype),
        grid=grid,
        in_specs=[
            pl.BlockSpec((tm, tk), lambda i, j, k: (i, k)),   # x
            pl.BlockSpec((tn, tk), lambda i, j, k: (j, k)),   # W (native layout)
            pl.BlockSpec((tm, R), lambda i, j, k: (i, 0)),    # x @ A
            pl.BlockSpec((R, tn), lambda i, j, k: (0, j)),    # alpha * B
            pl.BlockSpec((1, tn), lambda i, j, k: (0, j)),    # bias
        ],
        out_specs=pl.BlockSpec((tm, tn), lambda i, j, k: (i, j)),
        scratch_shapes=[pltpu.VMEM((tm, tn), jnp.float32)],
        compiler_params=pltpu.CompilerParams(
            dimension_semantics=("parallel", "parallel", "arbitrary"),
            vmem_limit_bytes=vmem_limit,
        ),
        cost_estimate=cost,
    )(xp, wp, xap, bp, biasp)

    return out[:M, :N].reshape(*lead, N)


if __name__ == "__main__":
    # Small shapes consistent with the module's forward.
    batch, seq = 2, 8
    in_features, out_features, rank = 32, 32, 4
    alpha = 1.0

    key = jax.random.PRNGKey(0)
    k_x, k_w, k_b, k_A, k_B = jax.random.split(key, 5)

    x = jax.random.normal(k_x, (batch, seq, in_features), dtype=jnp.float32)

    # nn.Linear parameters (frozen): weight (out, in), bias (out,)
    W = jax.random.normal(k_w, (out_features, in_features), dtype=jnp.float32) * 0.05
    bias = jax.random.normal(k_b, (out_features,), dtype=jnp.float32) * 0.05

    # LowRankAdapter parameters: A ~ randn / sqrt(rank); B defaults to zeros in
    # __init__, but gets small random values here so the LoRA branch contributes
    # non-trivially to the tested output.
    A = jax.random.normal(k_A, (in_features, rank), dtype=jnp.float32) / jnp.sqrt(rank)
    Bm = jax.random.normal(k_B, (rank, out_features), dtype=jnp.float32) * 0.05

    out = lora_linear_forward(x, W, bias, A, Bm, alpha)
    out = jax.block_until_ready(out)

    # Pure-JAX reference (same semantics as the PyTorch forward, unmerged path),
    # full-precision matmuls to compare apples-to-apples with the f32 kernel path.
    hp = lax.Precision.HIGHEST
    ref = (jnp.einsum("bsk,nk->bsn", x, W, precision=hp) + bias
           + alpha * jnp.einsum(
               "bsr,rn->bsn",
               jnp.einsum("bsk,kr->bsr", x, A, precision=hp),
               Bm, precision=hp))

    assert out.shape == (batch, seq, out_features)
    assert jnp.allclose(out, ref, atol=1e-3, rtol=1e-3), "mismatch vs reference"

    print("KERNEL_OK")
</pallas_src>

<mosaic_0001>
module attributes {stable_mosaic.version = 11 : i64} {
  func.func @_lora_linear_kernel(%arg0: i32, %arg1: i32, %arg2: i32, %arg3: memref<16x128xf32, #tpu.memory_space<vmem>>, %arg4: memref<128x128xf32, #tpu.memory_space<vmem>>, %arg5: memref<16x4xf32, #tpu.memory_space<vmem>>, %arg6: memref<4x128xf32, #tpu.memory_space<vmem>>, %arg7: memref<1x128xf32, #tpu.memory_space<vmem>>, %arg8: memref<16x128xf32, #tpu.memory_space<vmem>>, %arg9: memref<16x128xf32, #tpu.memory_space<vmem>>) attributes {dimension_semantics = [#tpu.dimension_semantics<parallel>, #tpu.dimension_semantics<parallel>, #tpu.dimension_semantics<arbitrary>], iteration_bounds = array<i64: 1, 1, 1>, scalar_prefetch = 0 : i64, scratch_operands = 1 : i64, tpu.core_type = #tpu.core_type<tc>, window_params = [{transform_indices = @transform_0, window_bounds = array<i64: 16, 128>}, {transform_indices = @transform_1, window_bounds = array<i64: 128, 128>}, {transform_indices = @transform_2, window_bounds = array<i64: 16, 4>}, {transform_indices = @transform_3, window_bounds = array<i64: 4, 128>}, {transform_indices = @transform_4, window_bounds = array<i64: 1, 128>}, {transform_indices = @transform_5, window_bounds = array<i64: 16, 128>}]} {
    %c0_i32 = arith.constant 0 : i32
    %0 = arith.cmpi eq, %arg2, %c0_i32 : i32
    %1 = arith.extui %0 : i1 to i32
    %c0_i32_0 = arith.constant 0 : i32
    %2 = arith.cmpi ne, %1, %c0_i32_0 : i32
    scf.if %2 {
      %c0_8 = arith.constant 0 : index
      %c0_9 = arith.constant 0 : index
      %12 = vector.load %arg7[%c0_8, %c0_9] : memref<1x128xf32, #tpu.memory_space<vmem>>, vector<1x128xf32>
      %13 = vector.shape_cast %12 : vector<1x128xf32> to vector<1x128xf32>
      %14 = vector.broadcast %13 : vector<1x128xf32> to vector<16x128xf32>
      %c0_10 = arith.constant 0 : index
      %c0_11 = arith.constant 0 : index
      %15 = vector.load %arg9[%c0_10, %c0_11] : memref<16x128xf32, #tpu.memory_space<vmem>>, vector<16x128xf32>
      tpu.vector_store %arg9[%c0_10, %c0_11], %14 {strides = array<i32>} : memref<16x128xf32, #tpu.memory_space<vmem>>, vector<16x128xf32>,
    } else {
    }
    %c0 = arith.constant 0 : index
    %c0_1 = arith.constant 0 : index
    %3 = vector.load %arg3[%c0, %c0_1] : memref<16x128xf32, #tpu.memory_space<vmem>>, vector<16x128xf32>
    %c0_2 = arith.constant 0 : index
    %c0_3 = arith.constant 0 : index
    %4 = vector.load %arg4[%c0_2, %c0_3] : memref<128x128xf32, #tpu.memory_space<vmem>>, vector<128x128xf32>
    %cst = arith.constant dense<0.000000e+00> : vector<16x128xf32>
    %5 = tpu.matmul %3, %4, %cst {dimension_numbers = #tpu.dot_dimension_numbers<[1], [1], [0], [0], [0, 0, 1, 0], [], []>, precision = #tpu.contract_precision<fp32>} : vector<16x128xf32>, vector<128x128xf32>, vector<16x128xf32> -> vector<16x128xf32>
    %c0_i32_4 = arith.constant 0 : i32
    %6 = arith.cmpi slt, %arg2, %c0_i32_4 : i32
    %7 = arith.extui %6 : i1 to i32
    %c0_i32_5 = arith.constant 0 : i32
    %8 = arith.cmpi ne, %7, %c0_i32_5 : i32
    scf.if %8 {
      %c0_8 = arith.constant 0 : index
      %c0_9 = arith.constant 0 : index
      %12 = vector.load %arg9[%c0_8, %c0_9] : memref<16x128xf32, #tpu.memory_space<vmem>>, vector<16x128xf32>
      %13 = arith.addf %12, %5 : vector<16x128xf32>
      %c0_10 = arith.constant 0 : index
      %c0_11 = arith.constant 0 : index
      %14 = vector.load %arg9[%c0_10, %c0_11] : memref<16x128xf32, #tpu.memory_space<vmem>>, vector<16x128xf32>
      tpu.vector_store %arg9[%c0_10, %c0_11], %13 {strides = array<i32>} : memref<16x128xf32, #tpu.memory_space<vmem>>, vector<16x128xf32>,
    } else {
    }
    %c0_i32_6 = arith.constant 0 : i32
    %9 = arith.cmpi eq, %arg2, %c0_i32_6 : i32
    %10 = arith.extui %9 : i1 to i32
    %c0_i32_7 = arith.constant 0 : i32
    %11 = arith.cmpi ne, %10, %c0_i32_7 : i32
    scf.if %11 {
      %c0_8 = arith.constant 0 : index
      %c0_9 = arith.constant 0 : index
      %12 = vector.load %arg5[%c0_8, %c0_9] : memref<16x4xf32, #tpu.memory_space<vmem>>, vector<16x4xf32>
      %c0_10 = arith.constant 0 : index
      %c0_11 = arith.constant 0 : index
      %13 = vector.load %arg6[%c0_10, %c0_11] : memref<4x128xf32, #tpu.memory_space<vmem>>, vector<4x128xf32>
      %cst_12 = arith.constant dense<0.000000e+00> : vector<16x128xf32>
      %14 = tpu.matmul %12, %13, %cst_12 {dimension_numbers = #tpu.dot_dimension_numbers<[1], [0], [0], [1], [0, 0, 1, 1], [], []>, precision = #tpu.contract_precision<fp32>} : vector<16x4xf32>, vector<4x128xf32>, vector<16x128xf32> -> vector<16x128xf32>
      %c0_13 = arith.constant 0 : index
      %c0_14 = arith.constant 0 : index
      %15 = vector.load %arg9[%c0_13, %c0_14] : memref<16x128xf32, #tpu.memory_space<vmem>>, vector<16x128xf32>
      %16 = arith.addf %15, %5 : vector<16x128xf32>
      %17 = arith.addf %16, %14 : vector<16x128xf32>
      %c0_15 = arith.constant 0 : index
      %c0_16 = arith.constant 0 : index
      %18 = vector.load %arg8[%c0_15, %c0_16] : memref<16x128xf32, #tpu.memory_space<vmem>>, vector<16x128xf32>
      tpu.vector_store %arg8[%c0_15, %c0_16], %17 {strides = array<i32>} : memref<16x128xf32, #tpu.memory_space<vmem>>, vector<16x128xf32>,
    } else {
    }
    return
  }
  func.func @transform_0(%arg0: i32, %arg1: i32, %arg2: i32) -> (i32, i32) {
    %c0_i32 = arith.constant 0 : i32
    return %arg0, %arg2 : i32, i32
  }
  func.func @transform_1(%arg0: i32, %arg1: i32, %arg2: i32) -> (i32, i32) {
    %c0_i32 = arith.constant 0 : i32
    return %arg1, %arg2 : i32, i32
  }
  func.func @transform_2(%arg0: i32, %arg1: i32, %arg2: i32) -> (i32, i32) {
    %c0_i32 = arith.constant 0 : i32
    %c0_i32_0 = arith.constant 0 : i32
    return %arg0, %c0_i32 : i32, i32
  }
  func.func @transform_3(%arg0: i32, %arg1: i32, %arg2: i32) -> (i32, i32) {
    %c0_i32 = arith.constant 0 : i32
    %c0_i32_0 = arith.constant 0 : i32
    return %c0_i32, %arg1 : i32, i32
  }
  func.func @transform_4(%arg0: i32, %arg1: i32, %arg2: i32) -> (i32, i32) {
    %c0_i32 = arith.constant 0 : i32
    %c0_i32_0 = arith.constant 0 : i32
    return %c0_i32, %arg1 : i32, i32
  }
  func.func @transform_5(%arg0: i32, %arg1: i32, %arg2: i32) -> (i32, i32) {
    %c0_i32 = arith.constant 0 : i32
    return %arg0, %arg1 : i32, i32
  }
}

</mosaic_0001>

<llo_original>
// kernel: lora_linear_forward.1
$region0: #{lora_linear_forward.1}
  #allocation0 [shape = 'u32[]', space=smem, size = 0x4, offset = 0x4, fixed_abs, tag = 'smem constant byte address 0x4 - core index']
  #allocation1 [shape = 'u32[144,128]{1,0:T(1,128)}', space=vmem, size = 0x12000, scoped, tag = 'internal scratch']
  #allocation2 [shape = 'f32[16,128]{1,0:T(8,128)}', space=vmem, size = 0x2000, scoped, tag = 'scratch operand']
  %s0 = inlined_call_operand.vmem [shape: f32[16,128], index: 0, kind: input, shape index: {}]
  %s1 = inlined_call_operand.vmem [shape: f32[128,128], index: 1, kind: input, shape index: {}]
  %s2 = inlined_call_operand.vmem [shape: f32[16,4], index: 2, kind: input, shape index: {}]
  %s3 = inlined_call_operand.vmem [shape: f32[4,128], index: 3, kind: input, shape index: {}]
  %s4 = inlined_call_operand.vmem [shape: f32[1,128], index: 4, kind: input, shape index: {}]
  %s5 = inlined_call_operand.vmem [shape: f32[16,128], index: 5, kind: output, shape index: {}]
  %s6 = sld [smem:[#allocation0]]
  $region42: #{lora_linear_forward.1} parent=0
    _
  %s8 = ssub.s32 1, %s6
  %s9 = scalar_select 0, %s8, %s6
  // Predicated region
  $region2: #{lora_linear_forward.1} parent=0 // pred_check
    _
  $region3: #{lora_linear_forward.1} parent=0 // pred_check_branch
    %11 = sbr.rel (0) target = $region5
  $region4: #{lora_linear_forward.1} parent=0 // pred_region
    _
  $region5: #{lora_linear_forward.1} parent=0 // pred_fallthru
    _
  // Predicated region
  $region6: #{lora_linear_forward.1} parent=0 // pred_check
    _
  $region7: #{lora_linear_forward.1} parent=0 // pred_check_branch
    %13 = sbr.rel (0) target = $region9
  $region8: #{lora_linear_forward.1} parent=0 // pred_region
    _
  $region9: #{lora_linear_forward.1} parent=0 // pred_fallthru
    _
  // Predicated region
  $region10: #{lora_linear_forward.1} parent=0 // pred_check
    _
  $region11: #{lora_linear_forward.1} parent=0 // pred_check_branch
    %15 = sbr.rel (0) target = $region13
  $region12: #{lora_linear_forward.1} parent=0 // pred_region
    _
  $region13: #{lora_linear_forward.1} parent=0 // pred_fallthru
    _
  // Predicated region
  $region14: #{lora_linear_forward.1} parent=0 // pred_check
    _
  $region15: #{lora_linear_forward.1} parent=0 // pred_check_branch
    %17 = sbr.rel (0) target = $region17
  $region16: #{lora_linear_forward.1} parent=0 // pred_region
    _
  $region17: #{lora_linear_forward.1} parent=0 // pred_fallthru
    _
  // Predicated region
  $region18: #{lora_linear_forward.1} parent=0 // pred_check
    _
  $region19: #{lora_linear_forward.1} parent=0 // pred_check_branch
    %19 = sbr.rel (0) target = $region21
  $region20: #{lora_linear_forward.1} parent=0 // pred_region
    _
  $region21: #{lora_linear_forward.1} parent=0 // pred_fallthru
    _
  %p20 = scmp.eq.s32.totalorder 0, 0
  // Predicated region
  $region22: #{lora_linear_forward.1} parent=0 // pred_check
    %p21 = pneg %p20
  $region23: #{lora_linear_forward.1} parent=0 // pred_check_branch
    %23 = sbr.rel (%p21) target = $region25
  $region24: #{lora_linear_forward.1} parent=0 // pred_region
    %v24 = vld [vmem:[%s4] sm:$0x1]
    %v26 = vlaneseq
    %v27 = vshrl.u32 %v26, 7
    %v28 = vsub.s32 0, %v27
    %v29 = vrot.slane %v24, %v28
    %31 = vst [vmem:[#allocation2] sm:$0xff] %v29
    %32 = vst [vmem:[#allocation2 + $0x8] sm:$0xff] %v29
  $region25: #{lora_linear_forward.1} parent=0 // pred_fallthru
    _
  %v33 = vld [vmem:[%s0] sm:$0xff]
  %v34 = vld [vmem:[%s0 + $0x8] sm:$0xff]
  %v35 = vld [vmem:[%s1] sm:$0xff]
  %v36 = vld [vmem:[%s1 + $0x8] sm:$0xff]
  %v37 = vld [vmem:[%s1 + $0x10] sm:$0xff]
  %v38 = vld [vmem:[%s1 + $0x18] sm:$0xff]
  %v39 = vld [vmem:[%s1 + $0x20] sm:$0xff]
  %v40 = vld [vmem:[%s1 + $0x28] sm:$0xff]
  %v41 = vld [vmem:[%s1 + $0x30] sm:$0xff]
  %v42 = vld [vmem:[%s1 + $0x38] sm:$0xff]
  %v43 = vld [vmem:[%s1 + $0x40] sm:$0xff]
  %v44 = vld [vmem:[%s1 + $0x48] sm:$0xff]
  %v45 = vld [vmem:[%s1 + $0x50] sm:$0xff]
  %v46 = vld [vmem:[%s1 + $0x58] sm:$0xff]
  %v47 = vld [vmem:[%s1 + $0x60] sm:$0xff]
  %v48 = vld [vmem:[%s1 + $0x68] sm:$0xff]
  %v49 = vld [vmem:[%s1 + $0x70] sm:$0xff]
  %v50 = vld [vmem:[%s1 + $0x78] sm:$0xff]
  %51 = vmatprep.subr.mxu0 0.0
  %v52 = vand.u32 %v35, 4294901760
  %53 = vmatpush1.xpose.msra.mxu0 %v52
  %54 = vmatprep.subr.mxu0 0.0
  %v55 = vand.u32 %v36, 4294901760
  %56 = vmatpush1.xpose.msra.mxu0 %v55
  %57 = vmatprep.subr.mxu0 0.0
  %v58 = vand.u32 %v37, 4294901760
  %59 = vmatpush1.xpose.msra.mxu0 %v58
  %60 = vmatprep.subr.mxu0 0.0
  %v61 = vand.u32 %v38, 4294901760
  %62 = vmatpush1.xpose.msra.mxu0 %v61
  %63 = vmatprep.subr.mxu0 0.0
  %v64 = vand.u32 %v39, 4294901760
  %65 = vmatpush1.xpose.msra.mxu0 %v64
  %66 = vmatprep.subr.mxu0 0.0
  %v67 = vand.u32 %v40, 4294901760
  %68 = vmatpush1.xpose.msra.mxu0 %v67
  %69 = vmatprep.subr.mxu0 0.0
  %v70 = vand.u32 %v41, 4294901760
  %71 = vmatpush1.xpose.msra.mxu0 %v70
  %72 = vmatprep.subr.mxu0 0.0
  %v73 = vand.u32 %v42, 4294901760
  %74 = vmatpush1.xpose.msra.mxu0 %v73
  %75 = vmatprep.subr.mxu0 0.0
  %v76 = vand.u32 %v43, 4294901760
  %77 = vmatpush1.xpose.msra.mxu0 %v76
  %78 = vmatprep.subr.mxu0 0.0
  %v79 = vand.u32 %v44, 4294901760
  %80 = vmatpush1.xpose.msra.mxu0 %v79
  %81 = vmatprep.subr.mxu0 0.0
  %v82 = vand.u32 %v45, 4294901760
  %83 = vmatpush1.xpose.msra.mxu0 %v82
  %84 = vmatprep.subr.mxu0 0.0
  %v85 = vand.u32 %v46, 4294901760
  %86 = vmatpush1.xpose.msra.mxu0 %v85
  %87 = vmatprep.subr.mxu0 0.0
  %v88 = vand.u32 %v47, 4294901760
  %89 = vmatpush1.xpose.msra.mxu0 %v88
  %90 = vmatprep.subr.mxu0 0.0
  %v91 = vand.u32 %v48, 4294901760
  %92 = vmatpush1.xpose.msra.mxu0 %v91
  %93 = vmatprep.subr.mxu0 0.0
  %v94 = vand.u32 %v49, 4294901760
  %95 = vmatpush1.xpose.msra.mxu0 %v94
  %96 = vmatprep.subr.mxu0 0.0
  %v97 = vand.u32 %v50, 4294901760
  %98 = vmatpush1.xpose.msra.mxu0 %v97
  %99 = vmatprep.subr.mxu0 0.0
  %100 = vmatpush1.xpose.msra.mxu0 0.0
  %101 = vmatprep.subr.mxu0 0.0
  %102 = vmatpush1.xpose.msra.mxu0 0.0
  %103 = vmatprep.subr.mxu0 0.0
  %104 = vmatpush1.xpose.msra.mxu0 0.0
  %105 = vmatprep.subr.mxu0 0.0
  %106 = vmatpush1.xpose.msra.mxu0 0.0
  %107 = vmatprep.subr.mxu0 0.0
  %108 = vmatpush1.xpose.msra.mxu0 0.0
  %109 = vmatprep.subr.mxu0 0.0
  %110 = vmatpush1.xpose.msra.mxu0 0.0
  %111 = vmatprep.subr.mxu0 0.0
  %112 = vmatpush1.xpose.msra.mxu0 0.0
  %113 = vmatprep.subr.mxu0 0.0
  %114 = vmatpush1.xpose.msra.mxu0 0.0
  %115 = vmatprep.subr.mxu0 0.0
  %116 = vmatpush1.xpose.msra.mxu0 0.0
  %117 = vmatprep.subr.mxu0 0.0
  %118 = vmatpush1.xpose.msra.mxu0 0.0
  %119 = vmatprep.subr.mxu0 0.0
  %120 = vmatpush1.xpose.msra.mxu0 0.0
  %121 = vmatprep.subr.mxu0 0.0
  %122 = vmatpush1.xpose.msra.mxu0 0.0
  %123 = vmatprep.subr.mxu0 0.0
  %124 = vmatpush1.xpose.msra.mxu0 0.0
  %125 = vmatprep.subr.mxu0 0.0
  %126 = vmatpush1.xpose.msra.mxu0 0.0
  %127 = vmatprep.subr.mxu0 0.0
  %128 = vmatpush1.xpose.msra.mxu0 0.0
  %129 = vmatprep.subr.mxu0 0.0
  %130 = vmatpush1.xpose.msra.mxu0 0.0
  %131 = vmatprep.mubr.f32.mxu0 0.0
  %v132 = vand.u32 %v33, 4294901760
  %v133 = vsub.f32 %v33, %v132
  %v134 = vand.u32 %v133, 4294901760
  %v135 = vsub.f32 %v133, %v134
  %v136 = vand.u32 %v135, 4294901760
  %137 = vmatmul.mubr.f32.gmra.mrb[0].mxu0 %v136
  %v138 = vpop.f32.mrb[0].mxu0
  %v139 = vadd.f32 0.0, %v138
  %v140 = vpop.f32.mrb[0].mxu0
  %141 = vmatprep.mubr.f32.mxu0 0.0
  %v142 = vand.u32 %v34, 4294901760
  %v143 = vsub.f32 %v34, %v142
  %v144 = vand.u32 %v143, 4294901760
  %v145 = vsub.f32 %v143, %v144
  %v146 = vand.u32 %v145, 4294901760
  %147 = vmatmul.mubr.f32.gmra.mrb[0].mxu0 %v146
  %v148 = vpop.f32.mrb[0].mxu0
  %v149 = vadd.f32 0.0, %v148
  %v150 = vpop.f32.mrb[0].mxu0
  %151 = vdwg.mxu0
  %152 = vmatprep.subr.mxu0 0.0
  %v153 = vand.u32 %v35, 4294901760
  %v154 = vsub.f32 %v35, %v153
  %v155 = vand.u32 %v154, 4294901760
  %v156 = vsub.f32 %v154, %v155
  %v157 = vand.u32 %v156, 4294901760
  %158 = vmatpush1.xpose.msra.mxu0 %v157
  %159 = vmatprep.subr.mxu0 0.0
  %v160 = vand.u32 %v36, 4294901760
  %v161 = vsub.f32 %v36, %v160
  %v162 = vand.u32 %v161, 4294901760
  %v163 = vsub.f32 %v161, %v162
  %v164 = vand.u32 %v163, 4294901760
  %165 = vmatpush1.xpose.msra.mxu0 %v164
  %166 = vmatprep.subr.mxu0 0.0
  %v167 = vand.u32 %v37, 4294901760
  %v168 = vsub.f32 %v37, %v167
  %v169 = vand.u32 %v168, 4294901760
  %v170 = vsub.f32 %v168, %v169
  %v171 = vand.u32 %v170, 4294901760
  %172 = vmatpush1.xpose.msra.mxu0 %v171
  %173 = vmatprep.subr.mxu0 0.0
  %v174 = vand.u32 %v38, 4294901760
  %v175 = vsub.f32 %v38, %v174
  %v176 = vand.u32 %v175, 4294901760
  %v177 = vsub.f32 %v175, %v176
  %v178 = vand.u32 %v177, 4294901760
  %179 = vmatpush1.xpose.msra.mxu0 %v178
  %180 = vmatprep.subr.mxu0 0.0
  %v181 = vand.u32 %v39, 4294901760
  %v182 = vsub.f32 %v39, %v181
  %v183 = vand.u32 %v182, 4294901760
  %v184 = vsub.f32 %v182, %v183
  %v185 = vand.u32 %v184, 4294901760
  %186 = vmatpush1.xpose.msra.mxu0 %v185
  %187 = vmatprep.subr.mxu0 0.0
  %v188 = vand.u32 %v40, 4294901760
  %v189 = vsub.f32 %v40, %v188
  %v190 = vand.u32 %v189, 4294901760
  %v191 = vsub.f32 %v189, %v190
  %v192 = vand.u32 %v191, 4294901760
  %193 = vmatpush1.xpose.msra.mxu0 %v192
  %194 = vmatprep.subr.mxu0 0.0
  %v195 = vand.u32 %v41, 4294901760
  %v196 = vsub.f32 %v41, %v195
  %v197 = vand.u32 %v196, 4294901760
  %v198 = vsub.f32 %v196, %v197
  %v199 = vand.u32 %v198, 4294901760
  %200 = vmatpush1.xpose.msra.mxu0 %v199
  %201 = vmatprep.subr.mxu0 0.0
  %v202 = vand.u32 %v42, 4294901760
  %v203 = vsub.f32 %v42, %v202
  %v204 = vand.u32 %v203, 4294901760
  %v205 = vsub.f32 %v203, %v204
  %v206 = vand.u32 %v205, 4294901760
  %207 = vmatpush1.xpose.msra.mxu0 %v206
  %208 = vmatprep.subr.mxu0 0.0
  %v209 = vand.u32 %v43, 4294901760
  %v210 = vsub.f32 %v43, %v209
  %v211 = vand.u32 %v210, 4294901760
  %v212 = vsub.f32 %v210, %v211
  %v213 = vand.u32 %v212, 4294901760
  %214 = vmatpush1.xpose.msra.mxu0 %v213
  %215 = vmatprep.subr.mxu0 0.0
  %v216 = vand.u32 %v44, 4294901760
  %v217 = vsub.f32 %v44, %v216
  %v218 = vand.u32 %v217, 4294901760
  %v219 = vsub.f32 %v217, %v218
  %v220 = vand.u32 %v219, 4294901760
  %221 = vmatpush1.xpose.msra.mxu0 %v220
  %222 = vmatprep.subr.mxu0 0.0
  %v223 = vand.u32 %v45, 4294901760
  %v224 = vsub.f32 %v45, %v223
  %v225 = vand.u32 %v224, 4294901760
  %v226 = vsub.f32 %v224, %v225
  %v227 = vand.u32 %v226, 4294901760
  %228 = vmatpush1.xpose.msra.mxu0 %v227
  %229 = vmatprep.subr.mxu0 0.0
  %v230 = vand.u32 %v46, 4294901760
  %v231 = vsub.f32 %v46, %v230
  %v232 = vand.u32 %v231, 4294901760
  %v233 = vsub.f32 %v231, %v232
  %v234 = vand.u32 %v233, 4294901760
  %235 = vmatpush1.xpose.msra.mxu0 %v234
  %236 = vmatprep.subr.mxu0 0.0
  %v237 = vand.u32 %v47, 4294901760
  %v238 = vsub.f32 %v47, %v237
  %v239 = vand.u32 %v238, 4294901760
  %v240 = vsub.f32 %v238, %v239
  %v241 = vand.u32 %v240, 4294901760
  %242 = vmatpush1.xpose.msra.mxu0 %v241
  %243 = vmatprep.subr.mxu0 0.0
  %v244 = vand.u32 %v48, 4294901760
  %v245 = vsub.f32 %v48, %v244
  %v246 = vand.u32 %v245, 4294901760
  %v247 = vsub.f32 %v245, %v246
  %v248 = vand.u32 %v247, 4294901760
  %249 = vmatpush1.xpose.msra.mxu0 %v248
  %250 = vmatprep.subr.mxu0 0.0
  %v251 = vand.u32 %v49, 4294901760
  %v252 = vsub.f32 %v49, %v251
  %v253 = vand.u32 %v252, 4294901760
  %v254 = vsub.f32 %v252, %v253
  %v255 = vand.u32 %v254, 4294901760
  %256 = vmatpush1.xpose.msra.mxu0 %v255
  %257 = vmatprep.subr.mxu0 0.0
  %v258 = vand.u32 %v50, 4294901760
  %v259 = vsub.f32 %v50, %v258
  %v260 = vand.u32 %v259, 4294901760
  %v261 = vsub.f32 %v259, %v260
  %v262 = vand.u32 %v261, 4294901760
  %263 = vmatpush1.xpose.msra.mxu0 %v262
  %264 = vmatprep.subr.mxu0 0.0
  %265 = vmatpush1.xpose.msra.mxu0 0.0
  %266 = vmatprep.subr.mxu0 0.0
  %267 = vmatpush1.xpose.msra.mxu0 0.0
  %268 = vmatprep.subr.mxu0 0.0
  %269 = vmatpush1.xpose.msra.mxu0 0.0
  %270 = vmatprep.subr.mxu0 0.0
  %271 = vmatpush1.xpose.msra.mxu0 0.0
  %272 = vmatprep.subr.mxu0 0.0
  %273 = vmatpush1.xpose.msra.mxu0 0.0
  %274 = vmatprep.subr.mxu0 0.0
  %275 = vmatpush1.xpose.msra.mxu0 0.0
  %276 = vmatprep.subr.mxu0 0.0
  %277 = vmatpush1.xpose.msra.mxu0 0.0
  %278 = vmatprep.subr.mxu0 0.0
  %279 = vmatpush1.xpose.msra.mxu0 0.0
  %280 = vmatprep.subr.mxu0 0.0
  %281 = vmatpush1.xpose.msra.mxu0 0.0
  %282 = vmatprep.subr.mxu0 0.0
  %283 = vmatpush1.xpose.msra.mxu0 0.0
  %284 = vmatprep.subr.mxu0 0.0
  %285 = vmatpush1.xpose.msra.mxu0 0.0
  %286 = vmatprep.subr.mxu0 0.0
  %287 = vmatpush1.xpose.msra.mxu0 0.0
  %288 = vmatprep.subr.mxu0 0.0
  %289 = vmatpush1.xpose.msra.mxu0 0.0
  %290 = vmatprep.subr.mxu0 0.0
  %291 = vmatpush1.xpose.msra.mxu0 0.0
  %292 = vmatprep.subr.mxu0 0.0
  %293 = vmatpush1.xpose.msra.mxu0 0.0
  %294 = vmatprep.subr.mxu0 0.0
  %295 = vmatpush1.xpose.msra.mxu0 0.0
  %296 = vmatprep.mubr.f32.mxu0 0.0
  %v297 = vand.u32 %v33, 4294901760
  %298 = vmatmul.mubr.f32.gmra.mrb[0].mxu0 %v297
  %v299 = vpop.f32.mrb[0].mxu0
  %v300 = vadd.f32 %v139, %v299
  %v301 = vpop.f32.mrb[0].mxu0
  %302 = vmatprep.mubr.f32.mxu0 0.0
  %v303 = vand.u32 %v34, 4294901760
  %304 = vmatmul.mubr.f32.gmra.mrb[0].mxu0 %v303
  %v305 = vpop.f32.mrb[0].mxu0
  %v306 = vadd.f32 %v149, %v305
  %v307 = vpop.f32.mrb[0].mxu0
  %308 = vdwg.mxu0
  %309 = vmatprep.subr.mxu0 0.0
  %v310 = vand.u32 %v35, 4294901760
  %v311 = vsub.f32 %v35, %v310
  %312 = vmatpush1.xpose.msra.mxu0 %v311
  %313 = vmatprep.subr.mxu0 0.0
  %v314 = vand.u32 %v36, 4294901760
  %v315 = vsub.f32 %v36, %v314
  %316 = vmatpush1.xpose.msra.mxu0 %v315
  %317 = vmatprep.subr.mxu0 0.0
  %v318 = vand.u32 %v37, 4294901760
  %v319 = vsub.f32 %v37, %v318
  %320 = vmatpush1.xpose.msra.mxu0 %v319
  %321 = vmatprep.subr.mxu0 0.0
  %v322 = vand.u32 %v38, 4294901760
  %v323 = vsub.f32 %v38, %v322
  %324 = vmatpush1.xpose.msra.mxu0 %v323
  %325 = vmatprep.subr.mxu0 0.0
  %v326 = vand.u32 %v39, 4294901760
  %v327 = vsub.f32 %v39, %v326
  %328 = vmatpush1.xpose.msra.mxu0 %v327
  %329 = vmatprep.subr.mxu0 0.0
  %v330 = vand.u32 %v40, 4294901760
  %v331 = vsub.f32 %v40, %v330
  %332 = vmatpush1.xpose.msra.mxu0 %v331
  %333 = vmatprep.subr.mxu0 0.0
  %v334 = vand.u32 %v41, 4294901760
  %v335 = vsub.f32 %v41, %v334
  %336 = vmatpush1.xpose.msra.mxu0 %v335
  %337 = vmatprep.subr.mxu0 0.0
  %v338 = vand.u32 %v42, 4294901760
  %v339 = vsub.f32 %v42, %v338
  %340 = vmatpush1.xpose.msra.mxu0 %v339
  %341 = vmatprep.subr.mxu0 0.0
  %v342 = vand.u32 %v43, 4294901760
  %v343 = vsub.f32 %v43, %v342
  %344 = vmatpush1.xpose.msra.mxu0 %v343
  %345 = vmatprep.subr.mxu0 0.0
  %v346 = vand.u32 %v44, 4294901760
  %v347 = vsub.f32 %v44, %v346
  %348 = vmatpush1.xpose.msra.mxu0 %v347
  %349 = vmatprep.subr.mxu0 0.0
  %v350 = vand.u32 %v45, 4294901760
  %v351 = vsub.f32 %v45, %v350
  %352 = vmatpush1.xpose.msra.mxu0 %v351
  %353 = vmatprep.subr.mxu0 0.0
  %v354 = vand.u32 %v46, 4294901760
  %v355 = vsub.f32 %v46, %v354
  %356 = vmatpush1.xpose.msra.mxu0 %v355
  %357 = vmatprep.subr.mxu0 0.0
  %v358 = vand.u32 %v47, 4294901760
  %v359 = vsub.f32 %v47, %v358
  %360 = vmatpush1.xpose.msra.mxu0 %v359
  %361 = vmatprep.subr.mxu0 0.0
  %v362 = vand.u32 %v48, 4294901760
  %v363 = vsub.f32 %v48, %v362
  %364 = vmatpush1.xpose.msra.mxu0 %v363
  %365 = vmatprep.subr.mxu0 0.0
  %v366 = vand.u32 %v49, 4294901760
  %v367 = vsub.f32 %v49, %v366
  %368 = vmatpush1.xpose.msra.mxu0 %v367
  %369 = vmatprep.subr.mxu0 0.0
  %v370 = vand.u32 %v50, 4294901760
  %v371 = vsub.f32 %v50, %v370
  %372 = vmatpush1.xpose.msra.mxu0 %v371
  %373 = vmatprep.subr.mxu0 0.0
  %374 = vmatpush1.xpose.msra.mxu0 0.0
  %375 = vmatprep.subr.mxu0 0.0
  %376 = vmatpush1.xpose.msra.mxu0 0.0
  %377 = vmatprep.subr.mxu0 0.0
  %378 = vmatpush1.xpose.msra.mxu0 0.0
  %379 = vmatprep.subr.mxu0 0.0
  %380 = vmatpush1.xpose.msra.mxu0 0.0
  %381 = vmatprep.subr.mxu0 0.0
  %382 = vmatpush1.xpose.msra.mxu0 0.0
  %383 = vmatprep.subr.mxu0 0.0
  %384 = vmatpush1.xpose.msra.mxu0 0.0
  %385 = vmatprep.subr.mxu0 0.0
  %386 = vmatpush1.xpose.msra.mxu0 0.0
  %387 = vmatprep.subr.mxu0 0.0
  %388 = vmatpush1.xpose.msra.mxu0 0.0
  %389 = vmatprep.subr.mxu0 0.0
  %390 = vmatpush1.xpose.msra.mxu0 0.0
  %391 = vmatprep.subr.mxu0 0.0
  %392 = vmatpush1.xpose.msra.mxu0 0.0
  %393 = vmatprep.subr.mxu0 0.0
  %394 = vmatpush1.xpose.msra.mxu0 0.0
  %395 = vmatprep.subr.mxu0 0.0
  %396 = vmatpush1.xpose.msra.mxu0 0.0
  %397 = vmatprep.subr.mxu0 0.0
  %398 = vmatpush1.xpose.msra.mxu0 0.0
  %399 = vmatprep.subr.mxu0 0.0
  %400 = vmatpush1.xpose.msra.mxu0 0.0
  %401 = vmatprep.subr.mxu0 0.0
  %402 = vmatpush1.xpose.msra.mxu0 0.0
  %403 = vmatprep.subr.mxu0 0.0
  %404 = vmatpush1.xpose.msra.mxu0 0.0
  %405 = vmatprep.mubr.f32.mxu0 0.0
  %v406 = vand.u32 %v33, 4294901760
  %v407 = vsub.f32 %v33, %v406
  %408 = vmatmul.mubr.f32.gmra.mrb[0].mxu0 %v407
  %v409 = vpop.f32.mrb[0].mxu0
  %v410 = vadd.f32 %v300, %v409
  %v411 = vpop.f32.mrb[0].mxu0
  %412 = vmatprep.mubr.f32.mxu0 0.0
  %v413 = vand.u32 %v34, 4294901760
  %v414 = vsub.f32 %v34, %v413
  %415 = vmatmul.mubr.f32.gmra.mrb[0].mxu0 %v414
  %v416 = vpop.f32.mrb[0].mxu0
  %v417 = vadd.f32 %v306, %v416
  %v418 = vpop.f32.mrb[0].mxu0
  %419 = vdwg.mxu0
  %420 = vmatprep.subr.mxu0 0.0
  %v421 = vand.u32 %v35, 4294901760
  %422 = vmatpush1.xpose.msra.mxu0 %v421
  %423 = vmatprep.subr.mxu0 0.0
  %v424 = vand.u32 %v36, 4294901760
  %425 = vmatpush1.xpose.msra.mxu0 %v424
  %426 = vmatprep.subr.mxu0 0.0
  %v427 = vand.u32 %v37, 4294901760
  %428 = vmatpush1.xpose.msra.mxu0 %v427
  %429 = vmatprep.subr.mxu0 0.0
  %v430 = vand.u32 %v38, 4294901760
  %431 = vmatpush1.xpose.msra.mxu0 %v430
  %432 = vmatprep.subr.mxu0 0.0
  %v433 = vand.u32 %v39, 4294901760
  %434 = vmatpush1.xpose.msra.mxu0 %v433
  %435 = vmatprep.subr.mxu0 0.0
  %v436 = vand.u32 %v40, 4294901760
  %437 = vmatpush1.xpose.msra.mxu0 %v436
  %438 = vmatprep.subr.mxu0 0.0
  %v439 = vand.u32 %v41, 4294901760
  %440 = vmatpush1.xpose.msra.mxu0 %v439
  %441 = vmatprep.subr.mxu0 0.0
  %v442 = vand.u32 %v42, 4294901760
  %443 = vmatpush1.xpose.msra.mxu0 %v442
  %444 = vmatprep.subr.mxu0 0.0
  %v445 = vand.u32 %v43, 4294901760
  %446 = vmatpush1.xpose.msra.mxu0 %v445
  %447 = vmatprep.subr.mxu0 0.0
  %v448 = vand.u32 %v44, 4294901760
  %449 = vmatpush1.xpose.msra.mxu0 %v448
  %450 = vmatprep.subr.mxu0 0.0
  %v451 = vand.u32 %v45, 4294901760
  %452 = vmatpush1.xpose.msra.mxu0 %v451
  %453 = vmatprep.subr.mxu0 0.0
  %v454 = vand.u32 %v46, 4294901760
  %455 = vmatpush1.xpose.msra.mxu0 %v454
  %456 = vmatprep.subr.mxu0 0.0
  %v457 = vand.u32 %v47, 4294901760
  %458 = vmatpush1.xpose.msra.mxu0 %v457
  %459 = vmatprep.subr.mxu0 0.0
  %v460 = vand.u32 %v48, 4294901760
  %461 = vmatpush1.xpose.msra.mxu0 %v460
  %462 = vmatprep.subr.mxu0 0.0
  %v463 = vand.u32 %v49, 4294901760
  %464 = vmatpush1.xpose.msra.mxu0 %v463
  %465 = vmatprep.subr.mxu0 0.0
  %v466 = vand.u32 %v50, 4294901760
  %467 = vmatpush1.xpose.msra.mxu0 %v466
  %468 = vmatprep.subr.mxu0 0.0
  %469 = vmatpush1.xpose.msra.mxu0 0.0
  %470 = vmatprep.subr.mxu0 0.0
  %471 = vmatpush1.xpose.msra.mxu0 0.0
  %472 = vmatprep.subr.mxu0 0.0
  %473 = vmatpush1.xpose.msra.mxu0 0.0
  %474 = vmatprep.subr.mxu0 0.0
  %475 = vmatpush1.xpose.msra.mxu0 0.0
  %476 = vmatprep.subr.mxu0 0.0
  %477 = vmatpush1.xpose.msra.mxu0 0.0
  %478 = vmatprep.subr.mxu0 0.0
  %479 = vmatpush1.xpose.msra.mxu0 0.0
  %480 = vmatprep.subr.mxu0 0.0
  %481 = vmatpush1.xpose.msra.mxu0 0.0
  %482 = vmatprep.subr.mxu0 0.0
  %483 = vmatpush1.xpose.msra.mxu0 0.0
  %484 = vmatprep.subr.mxu0 0.0
  %485 = vmatpush1.xpose.msra.mxu0 0.0
  %486 = vmatprep.subr.mxu0 0.0
  %487 = vmatpush1.xpose.msra.mxu0 0.0
  %488 = vmatprep.subr.mxu0 0.0
  %489 = vmatpush1.xpose.msra.mxu0 0.0
  %490 = vmatprep.subr.mxu0 0.0
  %491 = vmatpush1.xpose.msra.mxu0 0.0
  %492 = vmatprep.subr.mxu0 0.0
  %493 = vmatpush1.xpose.msra.mxu0 0.0
  %494 = vmatprep.subr.mxu0 0.0
  %495 = vmatpush1.xpose.msra.mxu0 0.0
  %496 = vmatprep.subr.mxu0 0.0
  %497 = vmatpush1.xpose.msra.mxu0 0.0
  %498 = vmatprep.subr.mxu0 0.0
  %499 = vmatpush1.xpose.msra.mxu0 0.0
  %500 = vmatprep.mubr.f32.mxu0 0.0
  %v501 = vand.u32 %v33, 4294901760
  %v502 = vsub.f32 %v33, %v501
  %v503 = vand.u32 %v502, 4294901760
  %504 = vmatmul.mubr.f32.gmra.mrb[0].mxu0 %v503
  %v505 = vpop.f32.mrb[0].mxu0
  %v506 = vadd.f32 %v410, %v505
  %v507 = vpop.f32.mrb[0].mxu0
  %508 = vmatprep.mubr.f32.mxu0 0.0
  %v509 = vand.u32 %v34, 4294901760
  %v510 = vsub.f32 %v34, %v509
  %v511 = vand.u32 %v510, 4294901760
  %512 = vmatmul.mubr.f32.gmra.mrb[0].mxu0 %v511
  %v513 = vpop.f32.mrb[0].mxu0
  %v514 = vadd.f32 %v417, %v513
  %v515 = vpop.f32.mrb[0].mxu0
  %516 = vdwg.mxu0
  %517 = vmatprep.subr.mxu0 0.0
  %v518 = vand.u32 %v35, 4294901760
  %v519 = vsub.f32 %v35, %v518
  %v520 = vand.u32 %v519, 4294901760
  %521 = vmatpush1.xpose.msra.mxu0 %v520
  %522 = vmatprep.subr.mxu0 0.0
  %v523 = vand.u32 %v36, 4294901760
  %v524 = vsub.f32 %v36, %v523
  %v525 = vand.u32 %v524, 4294901760
  %526 = vmatpush1.xpose.msra.mxu0 %v525
  %527 = vmatprep.subr.mxu0 0.0
  %v528 = vand.u32 %v37, 4294901760
  %v529 = vsub.f32 %v37, %v528
  %v530 = vand.u32 %v529, 4294901760
  %531 = vmatpush1.xpose.msra.mxu0 %v530
  %532 = vmatprep.subr.mxu0 0.0
  %v533 = vand.u32 %v38, 4294901760
  %v534 = vsub.f32 %v38, %v533
  %v535 = vand.u32 %v534, 4294901760
  %536 = vmatpush1.xpose.msra.mxu0 %v535
  %537 = vmatprep.subr.mxu0 0.0
  %v538 = vand.u32 %v39, 4294901760
  %v539 = vsub.f32 %v39, %v538
  %v540 = vand.u32 %v539, 4294901760
  %541 = vmatpush1.xpose.msra.mxu0 %v540
  %542 = vmatprep.subr.mxu0 0.0
  %v543 = vand.u32 %v40, 4294901760
  %v544 = vsub.f32 %v40, %v543
  %v545 = vand.u32 %v544, 4294901760
  %546 = vmatpush1.xpose.msra.mxu0 %v545
  %547 = vmatprep.subr.mxu0 0.0
  %v548 = vand.u32 %v41, 4294901760
  %v549 = vsub.f32 %v41, %v548
  %v550 = vand.u32 %v549, 4294901760
  %551 = vmatpush1.xpose.msra.mxu0 %v550
  %552 = vmatprep.subr.mxu0 0.0
  %v553 = vand.u32 %v42, 4294901760
  %v554 = vsub.f32 %v42, %v553
  %v555 = vand.u32 %v554, 4294901760
  %556 = vmatpush1.xpose.msra.mxu0 %v555
  %557 = vmatprep.subr.mxu0 0.0
  %v558 = vand.u32 %v43, 4294901760
  %v559 = vsub.f32 %v43, %v558
  %v560 = vand.u32 %v559, 4294901760
  %561 = vmatpush1.xpose.msra.mxu0 %v560
  %562 = vmatprep.subr.mxu0 0.0
  %v563 = vand.u32 %v44, 4294901760
  %v564 = vsub.f32 %v44, %v563
  %v565 = vand.u32 %v564, 4294901760
  %566 = vmatpush1.xpose.msra.mxu0 %v565
  %567 = vmatprep.subr.mxu0 0.0
  %v568 = vand.u32 %v45, 4294901760
  %v569 = vsub.f32 %v45, %v568
  %v570 = vand.u32 %v569, 4294901760
  %571 = vmatpush1.xpose.msra.mxu0 %v570
  %572 = vmatprep.subr.mxu0 0.0
  %v573 = vand.u32 %v46, 4294901760
  %v574 = vsub.f32 %v46, %v573
  %v575 = vand.u32 %v574, 4294901760
  %576 = vmatpush1.xpose.msra.mxu0 %v575
  %577 = vmatprep.subr.mxu0 0.0
  %v578 = vand.u32 %v47, 4294901760
  %v579 = vsub.f32 %v47, %v578
  %v580 = vand.u32 %v579, 4294901760
  %581 = vmatpush1.xpose.msra.mxu0 %v580
  %582 = vmatprep.subr.mxu0 0.0
  %v583 = vand.u32 %v48, 4294901760
  %v584 = vsub.f32 %v48, %v583
  %v585 = vand.u32 %v584, 4294901760
  %586 = vmatpush1.xpose.msra.mxu0 %v585
  %587 = vmatprep.subr.mxu0 0.0
  %v588 = vand.u32 %v49, 4294901760
  %v589 = vsub.f32 %v49, %v588
  %v590 = vand.u32 %v589, 4294901760
  %591 = vmatpush1.xpose.msra.mxu0 %v590
  %592 = vmatprep.subr.mxu0 0.0
  %v593 = vand.u32 %v50, 4294901760
  %v594 = vsub.f32 %v50, %v593
  %v595 = vand.u32 %v594, 4294901760
  %596 = vmatpush1.xpose.msra.mxu0 %v595
  %597 = vmatprep.subr.mxu0 0.0
  %598 = vmatpush1.xpose.msra.mxu0 0.0
  %599 = vmatprep.subr.mxu0 0.0
  %600 = vmatpush1.xpose.msra.mxu0 0.0
  %601 = vmatprep.subr.mxu0 0.0
  %602 = vmatpush1.xpose.msra.mxu0 0.0
  %603 = vmatprep.subr.mxu0 0.0
  %604 = vmatpush1.xpose.msra.mxu0 0.0
  %605 = vmatprep.subr.mxu0 0.0
  %606 = vmatpush1.xpose.msra.mxu0 0.0
  %607 = vmatprep.subr.mxu0 0.0
  %608 = vmatpush1.xpose.msra.mxu0 0.0
  %609 = vmatprep.subr.mxu0 0.0
  %610 = vmatpush1.xpose.msra.mxu0 0.0
  %611 = vmatprep.subr.mxu0 0.0
  %612 = vmatpush1.xpose.msra.mxu0 0.0
  %613 = vmatprep.subr.mxu0 0.0
  %614 = vmatpush1.xpose.msra.mxu0 0.0
  %615 = vmatprep.subr.mxu0 0.0
  %616 = vmatpush1.xpose.msra.mxu0 0.0
  %617 = vmatprep.subr.mxu0 0.0
  %618 = vmatpush1.xpose.msra.mxu0 0.0
  %619 = vmatprep.subr.mxu0 0.0
  %620 = vmatpush1.xpose.msra.mxu0 0.0
  %621 = vmatprep.subr.mxu0 0.0
  %622 = vmatpush1.xpose.msra.mxu0 0.0
  %623 = vmatprep.subr.mxu0 0.0
  %624 = vmatpush1.xpose.msra.mxu0 0.0
  %625 = vmatprep.subr.mxu0 0.0
  %626 = vmatpush1.xpose.msra.mxu0 0.0
  %627 = vmatprep.subr.mxu0 0.0
  %628 = vmatpush1.xpose.msra.mxu0 0.0
  %629 = vmatprep.mubr.f32.mxu0 0.0
  %v630 = vand.u32 %v33, 4294901760
  %631 = vmatmul.mubr.f32.gmra.mrb[0].mxu0 %v630
  %v632 = vpop.f32.mrb[0].mxu0
  %v633 = vadd.f32 %v506, %v632
  %v634 = vpop.f32.mrb[0].mxu0
  %635 = vmatprep.mubr.f32.mxu0 0.0
  %v636 = vand.u32 %v34, 4294901760
  %637 = vmatmul.mubr.f32.gmra.mrb[0].mxu0 %v636
  %v638 = vpop.f32.mrb[0].mxu0
  %v639 = vadd.f32 %v514, %v638
  %v640 = vpop.f32.mrb[0].mxu0
  %641 = vdwg.mxu0
  %642 = vmatprep.subr.mxu0 0.0
  %v643 = vand.u32 %v35, 4294901760
  %644 = vmatpush1.xpose.msra.mxu0 %v643
  %645 = vmatprep.subr.mxu0 0.0
  %v646 = vand.u32 %v36, 4294901760
  %647 = vmatpush1.xpose.msra.mxu0 %v646
  %648 = vmatprep.subr.mxu0 0.0
  %v649 = vand.u32 %v37, 4294901760
  %650 = vmatpush1.xpose.msra.mxu0 %v649
  %651 = vmatprep.subr.mxu0 0.0
  %v652 = vand.u32 %v38, 4294901760
  %653 = vmatpush1.xpose.msra.mxu0 %v652
  %654 = vmatprep.subr.mxu0 0.0
  %v655 = vand.u32 %v39, 4294901760
  %656 = vmatpush1.xpose.msra.mxu0 %v655
  %657 = vmatprep.subr.mxu0 0.0
  %v658 = vand.u32 %v40, 4294901760
  %659 = vmatpush1.xpose.msra.mxu0 %v658
  %660 = vmatprep.subr.mxu0 0.0
  %v661 = vand.u32 %v41, 4294901760
  %662 = vmatpush1.xpose.msra.mxu0 %v661
  %663 = vmatprep.subr.mxu0 0.0
  %v664 = vand.u32 %v42, 4294901760
  %665 = vmatpush1.xpose.msra.mxu0 %v664
  %666 = vmatprep.subr.mxu0 0.0
  %v667 = vand.u32 %v43, 4294901760
  %668 = vmatpush1.xpose.msra.mxu0 %v667
  %669 = vmatprep.subr.mxu0 0.0
  %v670 = vand.u32 %v44, 4294901760
  %671 = vmatpush1.xpose.msra.mxu0 %v670
  %672 = vmatprep.subr.mxu0 0.0
  %v673 = vand.u32 %v45, 4294901760
  %674 = vmatpush1.xpose.msra.mxu0 %v673
  %675 = vmatprep.subr.mxu0 0.0
  %v676 = vand.u32 %v46, 4294901760
  %677 = vmatpush1.xpose.msra.mxu0 %v676
  %678 = vmatprep.subr.mxu0 0.0
  %v679 = vand.u32 %v47, 4294901760
  %680 = vmatpush1.xpose.msra.mxu0 %v679
  %681 = vmatprep.subr.mxu0 0.0
  %v682 = vand.u32 %v48, 4294901760
  %683 = vmatpush1.xpose.msra.mxu0 %v682
  %684 = vmatprep.subr.mxu0 0.0
  %v685 = vand.u32 %v49, 4294901760
  %686 = vmatpush1.xpose.msra.mxu0 %v685
  %687 = vmatprep.subr.mxu0 0.0
  %v688 = vand.u32 %v50, 4294901760
  %689 = vmatpush1.xpose.msra.mxu0 %v688
  %690 = vmatprep.subr.mxu0 0.0
  %691 = vmatpush1.xpose.msra.mxu0 0.0
  %692 = vmatprep.subr.mxu0 0.0
  %693 = vmatpush1.xpose.msra.mxu0 0.0
  %694 = vmatprep.subr.mxu0 0.0
  %695 = vmatpush1.xpose.msra.mxu0 0.0
  %696 = vmatprep.subr.mxu0 0.0
  %697 = vmatpush1.xpose.msra.mxu0 0.0
  %698 = vmatprep.subr.mxu0 0.0
  %699 = vmatpush1.xpose.msra.mxu0 0.0
  %700 = vmatprep.subr.mxu0 0.0
  %701 = vmatpush1.xpose.msra.mxu0 0.0
  %702 = vmatprep.subr.mxu0 0.0
  %703 = vmatpush1.xpose.msra.mxu0 0.0
  %704 = vmatprep.subr.mxu0 0.0
  %705 = vmatpush1.xpose.msra.mxu0 0.0
  %706 = vmatprep.subr.mxu0 0.0
  %707 = vmatpush1.xpose.msra.mxu0 0.0
  %708 = vmatprep.subr.mxu0 0.0
  %709 = vmatpush1.xpose.msra.mxu0 0.0
  %710 = vmatprep.subr.mxu0 0.0
  %711 = vmatpush1.xpose.msra.mxu0 0.0
  %712 = vmatprep.subr.mxu0 0.0
  %713 = vmatpush1.xpose.msra.mxu0 0.0
  %714 = vmatprep.subr.mxu0 0.0
  %715 = vmatpush1.xpose.msra.mxu0 0.0
  %716 = vmatprep.subr.mxu0 0.0
  %717 = vmatpush1.xpose.msra.mxu0 0.0
  %718 = vmatprep.subr.mxu0 0.0
  %719 = vmatpush1.xpose.msra.mxu0 0.0
  %720 = vmatprep.subr.mxu0 0.0
  %721 = vmatpush1.xpose.msra.mxu0 0.0
  %722 = vmatprep.mubr.f32.mxu0 0.0
  %v723 = vand.u32 %v33, 4294901760
  %724 = vmatmul.mubr.f32.gmra.mrb[0].mxu0 %v723
  %v725 = vpop.f32.mrb[0].mxu0
  %v726 = vadd.f32 %v633, %v725
  %v727 = vpop.f32.mrb[0].mxu0
  %728 = vmatprep.mubr.f32.mxu0 0.0
  %v729 = vand.u32 %v34, 4294901760
  %730 = vmatmul.mubr.f32.gmra.mrb[0].mxu0 %v729
  %v731 = vpop.f32.mrb[0].mxu0
  %v732 = vadd.f32 %v639, %v731
  %v733 = vpop.f32.mrb[0].mxu0
  %734 = vdwg.mxu0
  %p735 = scmp.lt.s32.totalorder 0, 0
  // Predicated region
  $region26: #{lora_linear_forward.1} parent=0 // pred_check
    %p736 = pneg %p735
  $region27: #{lora_linear_forward.1} parent=0 // pred_check_branch
    %738 = sbr.rel (%p736) target = $region29
  $region28: #{lora_linear_forward.1} parent=0 // pred_region
    %v739 = vld [vmem:[#allocation2] sm:$0xff]
    %v740 = vld [vmem:[#allocation2 + $0x8] sm:$0xff]
    %v741 = vadd.f32 %v739, %v726
    %v742 = vadd.f32 %v740, %v732
    %743 = vst [vmem:[#allocation2] sm:$0xff] %v741
    %744 = vst [vmem:[#allocation2 + $0x8] sm:$0xff] %v742
  $region29: #{lora_linear_forward.1} parent=0 // pred_fallthru
    _
  // Predicated region
  $region30: #{lora_linear_forward.1} parent=0 // pred_check
    %p745 = pneg %p20
  $region31: #{lora_linear_forward.1} parent=0 // pred_check_branch
    %747 = sbr.rel (%p745) target = $region33
  $region32: #{lora_linear_forward.1} parent=0 // pred_region
    %v748 = vld [vmem:[%s2] sm:$0xff]
    %v749 = vld [vmem:[%s2 + $0x8] sm:$0xff]
    %v750 = vld [vmem:[%s3] sm:$0xf]
    %vm751 = vcmask 31744
    %v753 = vsel %vm751, %v748, 0
    %v756 = vsel %vm751, %v749, 0
    %vm758 = vcmask 1043456
    %v760 = vsel %vm758, %v750, 0
    %762 = vmatprep.subr.mxu0 0.0
    %v763 = vand.u32 %v760, 4294901760
    %764 = vmatpush1.msra.mxu0 %v763
    %765 = vmatprep.subr.mxu0 0.0
    %766 = vmatpush1.msra.mxu0 0.0
    %767 = vmatprep.subr.mxu0 0.0
    %768 = vmatpush1.msra.mxu0 0.0
    %769 = vmatprep.subr.mxu0 0.0
    %770 = vmatpush1.msra.mxu0 0.0
    %771 = vmatprep.subr.mxu0 0.0
    %772 = vmatpush1.msra.mxu0 0.0
    %773 = vmatprep.subr.mxu0 0.0
    %774 = vmatpush1.msra.mxu0 0.0
    %775 = vmatprep.subr.mxu0 0.0
    %776 = vmatpush1.msra.mxu0 0.0
    %777 = vmatprep.subr.mxu0 0.0
    %778 = vmatpush1.msra.mxu0 0.0
    %779 = vmatprep.subr.mxu0 0.0
    %780 = vmatpush1.msra.mxu0 0.0
    %781 = vmatprep.subr.mxu0 0.0
    %782 = vmatpush1.msra.mxu0 0.0
    %783 = vmatprep.subr.mxu0 0.0
    %784 = vmatpush1.msra.mxu0 0.0
    %785 = vmatprep.subr.mxu0 0.0
    %786 = vmatpush1.msra.mxu0 0.0
    %787 = vmatprep.subr.mxu0 0.0
    %788 = vmatpush1.msra.mxu0 0.0
    %789 = vmatprep.subr.mxu0 0.0
    %790 = vmatpush1.msra.mxu0 0.0
    %791 = vmatprep.subr.mxu0 0.0
    %792 = vmatpush1.msra.mxu0 0.0
    %793 = vmatprep.subr.mxu0 0.0
    %794 = vmatpush1.msra.mxu0 0.0
    %795 = vmatprep.subr.mxu0 0.0
    %796 = vmatpush1.msra.mxu0 0.0
    %797 = vmatprep.subr.mxu0 0.0
    %798 = vmatpush1.msra.mxu0 0.0
    %799 = vmatprep.subr.mxu0 0.0
    %800 = vmatpush1.msra.mxu0 0.0
    %801 = vmatprep.subr.mxu0 0.0
    %802 = vmatpush1.msra.mxu0 0.0
    %803 = vmatprep.subr.mxu0 0.0
    %804 = vmatpush1.msra.mxu0 0.0
    %805 = vmatprep.subr.mxu0 0.0
    %806 = vmatpush1.msra.mxu0 0.0
    %807 = vmatprep.subr.mxu0 0.0
    %808 = vmatpush1.msra.mxu0 0.0
    %809 = vmatprep.subr.mxu0 0.0
    %810 = vmatpush1.msra.mxu0 0.0
    %811 = vmatprep.subr.mxu0 0.0
    %812 = vmatpush1.msra.mxu0 0.0
    %813 = vmatprep.subr.mxu0 0.0
    %814 = vmatpush1.msra.mxu0 0.0
    %815 = vmatprep.subr.mxu0 0.0
    %816 = vmatpush1.msra.mxu0 0.0
    %817 = vmatprep.subr.mxu0 0.0
    %818 = vmatpush1.msra.mxu0 0.0
    %819 = vmatprep.subr.mxu0 0.0
    %820 = vmatpush1.msra.mxu0 0.0
    %821 = vmatprep.subr.mxu0 0.0
    %822 = vmatpush1.msra.mxu0 0.0
    %823 = vmatprep.subr.mxu0 0.0
    %824 = vmatpush1.msra.mxu0 0.0
    %825 = vmatprep.subr.mxu0 0.0
    %826 = vmatpush1.msra.mxu0 0.0
    %827 = vmatprep.mubr.f32.mxu0 0.0
    %v828 = vand.u32 %v753, 4294901760
    %v829 = vsub.f32 %v753, %v828
    %v830 = vand.u32 %v829, 4294901760
    %v831 = vsub.f32 %v829, %v830
    %v832 = vand.u32 %v831, 4294901760
    %833 = vmatmul.mubr.f32.gmra.mrb[0].mxu0 %v832
    %v834 = vpop.f32.mrb[0].mxu0
    %v835 = vadd.f32 0.0, %v834
    %v836 = vpop.f32.mrb[0].mxu0
    %837 = vmatprep.mubr.f32.mxu0 0.0
    %v838 = vand.u32 %v756, 4294901760
    %v839 = vsub.f32 %v756, %v838
    %v840 = vand.u32 %v839, 4294901760
    %v841 = vsub.f32 %v839, %v840
    %v842 = vand.u32 %v841, 4294901760
    %843 = vmatmul.mubr.f32.gmra.mrb[0].mxu0 %v842
    %v844 = vpop.f32.mrb[0].mxu0
    %v845 = vadd.f32 0.0, %v844
    %v846 = vpop.f32.mrb[0].mxu0
    %847 = vdwg.mxu0
    %848 = vmatprep.subr.mxu0 0.0
    %v849 = vand.u32 %v760, 4294901760
    %v850 = vsub.f32 %v760, %v849
    %v851 = vand.u32 %v850, 4294901760
    %v852 = vsub.f32 %v850, %v851
    %v853 = vand.u32 %v852, 4294901760
    %854 = vmatpush1.msra.mxu0 %v853
    %855 = vmatprep.subr.mxu0 0.0
    %856 = vmatpush1.msra.mxu0 0.0
    %857 = vmatprep.subr.mxu0 0.0
    %858 = vmatpush1.msra.mxu0 0.0
    %859 = vmatprep.subr.mxu0 0.0
    %860 = vmatpush1.msra.mxu0 0.0
    %861 = vmatprep.subr.mxu0 0.0
    %862 = vmatpush1.msra.mxu0 0.0
    %863 = vmatprep.subr.mxu0 0.0
    %864 = vmatpush1.msra.mxu0 0.0
    %865 = vmatprep.subr.mxu0 0.0
    %866 = vmatpush1.msra.mxu0 0.0
    %867 = vmatprep.subr.mxu0 0.0
    %868 = vmatpush1.msra.mxu0 0.0
    %869 = vmatprep.subr.mxu0 0.0
    %870 = vmatpush1.msra.mxu0 0.0
    %871 = vmatprep.subr.mxu0 0.0
    %872 = vmatpush1.msra.mxu0 0.0
    %873 = vmatprep.subr.mxu0 0.0
    %874 = vmatpush1.msra.mxu0 0.0
    %875 = vmatprep.subr.mxu0 0.0
    %876 = vmatpush1.msra.mxu0 0.0
    %877 = vmatprep.subr.mxu0 0.0
    %878 = vmatpush1.msra.mxu0 0.0
    %879 = vmatprep.subr.mxu0 0.0
    %880 = vmatpush1.msra.mxu0 0.0
    %881 = vmatprep.subr.mxu0 0.0
    %882 = vmatpush1.msra.mxu0 0.0
    %883 = vmatprep.subr.mxu0 0.0
    %884 = vmatpush1.msra.mxu0 0.0
    %885 = vmatprep.subr.mxu0 0.0
    %886 = vmatpush1.msra.mxu0 0.0
    %887 = vmatprep.subr.mxu0 0.0
    %888 = vmatpush1.msra.mxu0 0.0
    %889 = vmatprep.subr.mxu0 0.0
    %890 = vmatpush1.msra.mxu0 0.0
    %891 = vmatprep.subr.mxu0 0.0
    %892 = vmatpush1.msra.mxu0 0.0
    %893 = vmatprep.subr.mxu0 0.0
    %894 = vmatpush1.msra.mxu0 0.0
    %895 = vmatprep.subr.mxu0 0.0
    %896 = vmatpush1.msra.mxu0 0.0
    %897 = vmatprep.subr.mxu0 0.0
    %898 = vmatpush1.msra.mxu0 0.0
    %899 = vmatprep.subr.mxu0 0.0
    %900 = vmatpush1.msra.mxu0 0.0
    %901 = vmatprep.subr.mxu0 0.0
    %902 = vmatpush1.msra.mxu0 0.0
    %903 = vmatprep.subr.mxu0 0.0
    %904 = vmatpush1.msra.mxu0 0.0
    %905 = vmatprep.subr.mxu0 0.0
    %906 = vmatpush1.msra.mxu0 0.0
    %907 = vmatprep.subr.mxu0 0.0
    %908 = vmatpush1.msra.mxu0 0.0
    %909 = vmatprep.subr.mxu0 0.0
    %910 = vmatpush1.msra.mxu0 0.0
    %911 = vmatprep.subr.mxu0 0.0
    %912 = vmatpush1.msra.mxu0 0.0
    %913 = vmatprep.subr.mxu0 0.0
    %914 = vmatpush1.msra.mxu0 0.0
    %915 = vmatprep.subr.mxu0 0.0
    %916 = vmatpush1.msra.mxu0 0.0
    %917 = vmatprep.mubr.f32.mxu0 0.0
    %v918 = vand.u32 %v753, 4294901760
    %919 = vmatmul.mubr.f32.gmra.mrb[0].mxu0 %v918
    %v920 = vpop.f32.mrb[0].mxu0
    %v921 = vadd.f32 %v835, %v920
    %v922 = vpop.f32.mrb[0].mxu0
    %923 = vmatprep.mubr.f32.mxu0 0.0
    %v924 = vand.u32 %v756, 4294901760
    %925 = vmatmul.mubr.f32.gmra.mrb[0].mxu0 %v924
    %v926 = vpop.f32.mrb[0].mxu0
    %v927 = vadd.f32 %v845, %v926
    %v928 = vpop.f32.mrb[0].mxu0
    %929 = vdwg.mxu0
    %930 = vmatprep.subr.mxu0 0.0
    %v931 = vand.u32 %v760, 4294901760
    %v932 = vsub.f32 %v760, %v931
    %933 = vmatpush1.msra.mxu0 %v932
    %934 = vmatprep.subr.mxu0 0.0
    %935 = vmatpush1.msra.mxu0 0.0
    %936 = vmatprep.subr.mxu0 0.0
    %937 = vmatpush1.msra.mxu0 0.0
    %938 = vmatprep.subr.mxu0 0.0
    %939 = vmatpush1.msra.mxu0 0.0
    %940 = vmatprep.subr.mxu0 0.0
    %941 = vmatpush1.msra.mxu0 0.0
    %942 = vmatprep.subr.mxu0 0.0
    %943 = vmatpush1.msra.mxu0 0.0
    %944 = vmatprep.subr.mxu0 0.0
    %945 = vmatpush1.msra.mxu0 0.0
    %946 = vmatprep.subr.mxu0 0.0
    %947 = vmatpush1.msra.mxu0 0.0
    %948 = vmatprep.subr.mxu0 0.0
    %949 = vmatpush1.msra.mxu0 0.0
    %950 = vmatprep.subr.mxu0 0.0
    %951 = vmatpush1.msra.mxu0 0.0
    %952 = vmatprep.subr.mxu0 0.0
    %953 = vmatpush1.msra.mxu0 0.0
    %954 = vmatprep.subr.mxu0 0.0
    %955 = vmatpush1.msra.mxu0 0.0
    %956 = vmatprep.subr.mxu0 0.0
    %957 = vmatpush1.msra.mxu0 0.0
    %958 = vmatprep.subr.mxu0 0.0
    %959 = vmatpush1.msra.mxu0 0.0
    %960 = vmatprep.subr.mxu0 0.0
    %961 = vmatpush1.msra.mxu0 0.0
    %962 = vmatprep.subr.mxu0 0.0
    %963 = vmatpush1.msra.mxu0 0.0
    %964 = vmatprep.subr.mxu0 0.0
    %965 = vmatpush1.msra.mxu0 0.0
    %966 = vmatprep.subr.mxu0 0.0
    %967 = vmatpush1.msra.mxu0 0.0
    %968 = vmatprep.subr.mxu0 0.0
    %969 = vmatpush1.msra.mxu0 0.0
    %970 = vmatprep.subr.mxu0 0.0
    %971 = vmatpush1.msra.mxu0 0.0
    %972 = vmatprep.subr.mxu0 0.0
    %973 = vmatpush1.msra.mxu0 0.0
    %974 = vmatprep.subr.mxu0 0.0
    %975 = vmatpush1.msra.mxu0 0.0
    %976 = vmatprep.subr.mxu0 0.0
    %977 = vmatpush1.msra.mxu0 0.0
    %978 = vmatprep.subr.mxu0 0.0
    %979 = vmatpush1.msra.mxu0 0.0
    %980 = vmatprep.subr.mxu0 0.0
    %981 = vmatpush1.msra.mxu0 0.0
    %982 = vmatprep.subr.mxu0 0.0
    %983 = vmatpush1.msra.mxu0 0.0
    %984 = vmatprep.subr.mxu0 0.0
    %985 = vmatpush1.msra.mxu0 0.0
    %986 = vmatprep.subr.mxu0 0.0
    %987 = vmatpush1.msra.mxu0 0.0
    %988 = vmatprep.subr.mxu0 0.0
    %989 = vmatpush1.msra.mxu0 0.0
    %990 = vmatprep.subr.mxu0 0.0
    %991 = vmatpush1.msra.mxu0 0.0
    %992 = vmatprep.subr.mxu0 0.0
    %993 = vmatpush1.msra.mxu0 0.0
    %994 = vmatprep.subr.mxu0 0.0
    %995 = vmatpush1.msra.mxu0 0.0
    %996 = vmatprep.mubr.f32.mxu0 0.0
    %v997 = vand.u32 %v753, 4294901760
    %v998 = vsub.f32 %v753, %v997
    %999 = vmatmul.mubr.f32.gmra.mrb[0].mxu0 %v998
    %v1000 = vpop.f32.mrb[0].mxu0
    %v1001 = vadd.f32 %v921, %v1000
    %v1002 = vpop.f32.mrb[0].mxu0
    %1003 = vmatprep.mubr.f32.mxu0 0.0
    %v1004 = vand.u32 %v756, 4294901760
    %v1005 = vsub.f32 %v756, %v1004
    %1006 = vmatmul.mubr.f32.gmra.mrb[0].mxu0 %v1005
    %v1007 = vpop.f32.mrb[0].mxu0
    %v1008 = vadd.f32 %v927, %v1007
    %v1009 = vpop.f32.mrb[0].mxu0
    %1010 = vdwg.mxu0
    %1011 = vmatprep.subr.mxu0 0.0
    %v1012 = vand.u32 %v760, 4294901760
    %1013 = vmatpush1.msra.mxu0 %v1012
    %1014 = vmatprep.subr.mxu0 0.0
    %1015 = vmatpush1.msra.mxu0 0.0
    %1016 = vmatprep.subr.mxu0 0.0
    %1017 = vmatpush1.msra.mxu0 0.0
    %1018 = vmatprep.subr.mxu0 0.0
    %1019 = vmatpush1.msra.mxu0 0.0
    %1020 = vmatprep.subr.mxu0 0.0
    %1021 = vmatpush1.msra.mxu0 0.0
    %1022 = vmatprep.subr.mxu0 0.0
    %1023 = vmatpush1.msra.mxu0 0.0
    %1024 = vmatprep.subr.mxu0 0.0
    %1025 = vmatpush1.msra.mxu0 0.0
    %1026 = vmatprep.subr.mxu0 0.0
    %1027 = vmatpush1.msra.mxu0 0.0
    %1028 = vmatprep.subr.mxu0 0.0
    %1029 = vmatpush1.msra.mxu0 0.0
    %1030 = vmatprep.subr.mxu0 0.0
    %1031 = vmatpush1.msra.mxu0 0.0
    %1032 = vmatprep.subr.mxu0 0.0
    %1033 = vmatpush1.msra.mxu0 0.0
    %1034 = vmatprep.subr.mxu0 0.0
    %1035 = vmatpush1.msra.mxu0 0.0
    %1036 = vmatprep.subr.mxu0 0.0
    %1037 = vmatpush1.msra.mxu0 0.0
    %1038 = vmatprep.subr.mxu0 0.0
    %1039 = vmatpush1.msra.mxu0 0.0
    %1040 = vmatprep.subr.mxu0 0.0
    %1041 = vmatpush1.msra.mxu0 0.0
    %1042 = vmatprep.subr.mxu0 0.0
    %1043 = vmatpush1.msra.mxu0 0.0
    %1044 = vmatprep.subr.mxu0 0.0
    %1045 = vmatpush1.msra.mxu0 0.0
    %1046 = vmatprep.subr.mxu0 0.0
    %1047 = vmatpush1.msra.mxu0 0.0
    %1048 = vmatprep.subr.mxu0 0.0
    %1049 = vmatpush1.msra.mxu0 0.0
    %1050 = vmatprep.subr.mxu0 0.0
    %1051 = vmatpush1.msra.mxu0 0.0
    %1052 = vmatprep.subr.mxu0 0.0
    %1053 = vmatpush1.msra.mxu0 0.0
    %1054 = vmatprep.subr.mxu0 0.0
    %1055 = vmatpush1.msra.mxu0 0.0
    %1056 = vmatprep.subr.mxu0 0.0
    %1057 = vmatpush1.msra.mxu0 0.0
    %1058 = vmatprep.subr.mxu0 0.0
    %1059 = vmatpush1.msra.mxu0 0.0
    %1060 = vmatprep.subr.mxu0 0.0
    %1061 = vmatpush1.msra.mxu0 0.0
    %1062 = vmatprep.subr.mxu0 0.0
    %1063 = vmatpush1.msra.mxu0 0.0
    %1064 = vmatprep.subr.mxu0 0.0
    %1065 = vmatpush1.msra.mxu0 0.0
    %1066 = vmatprep.subr.mxu0 0.0
    %1067 = vmatpush1.msra.mxu0 0.0
    %1068 = vmatprep.subr.mxu0 0.0
    %1069 = vmatpush1.msra.mxu0 0.0
    %1070 = vmatprep.subr.mxu0 0.0
    %1071 = vmatpush1.msra.mxu0 0.0
    %1072 = vmatprep.subr.mxu0 0.0
    %1073 = vmatpush1.msra.mxu0 0.0
    %1074 = vmatprep.subr.mxu0 0.0
    %1075 = vmatpush1.msra.mxu0 0.0
    %1076 = vmatprep.mubr.f32.mxu0 0.0
    %v1077 = vand.u32 %v753, 4294901760
    %v1078 = vsub.f32 %v753, %v1077
    %v1079 = vand.u32 %v1078, 4294901760
    %1080 = vmatmul.mubr.f32.gmra.mrb[0].mxu0 %v1079
    %v1081 = vpop.f32.mrb[0].mxu0
    %v1082 = vadd.f32 %v1001, %v1081
    %v1083 = vpop.f32.mrb[0].mxu0
    %1084 = vmatprep.mubr.f32.mxu0 0.0
    %v1085 = vand.u32 %v756, 4294901760
    %v1086 = vsub.f32 %v756, %v1085
    %v1087 = vand.u32 %v1086, 4294901760
    %1088 = vmatmul.mubr.f32.gmra.mrb[0].mxu0 %v1087
    %v1089 = vpop.f32.mrb[0].mxu0
    %v1090 = vadd.f32 %v1008, %v1089
    %v1091 = vpop.f32.mrb[0].mxu0
    %1092 = vdwg.mxu0
    %1093 = vmatprep.subr.mxu0 0.0
    %v1094 = vand.u32 %v760, 4294901760
    %v1095 = vsub.f32 %v760, %v1094
    %v1096 = vand.u32 %v1095, 4294901760
    %1097 = vmatpush1.msra.mxu0 %v1096
    %1098 = vmatprep.subr.mxu0 0.0
    %1099 = vmatpush1.msra.mxu0 0.0
    %1100 = vmatprep.subr.mxu0 0.0
    %1101 = vmatpush1.msra.mxu0 0.0
    %1102 = vmatprep.subr.mxu0 0.0
    %1103 = vmatpush1.msra.mxu0 0.0
    %1104 = vmatprep.subr.mxu0 0.0
    %1105 = vmatpush1.msra.mxu0 0.0
    %1106 = vmatprep.subr.mxu0 0.0
    %1107 = vmatpush1.msra.mxu0 0.0
    %1108 = vmatprep.subr.mxu0 0.0
    %1109 = vmatpush1.msra.mxu0 0.0
    %1110 = vmatprep.subr.mxu0 0.0
    %1111 = vmatpush1.msra.mxu0 0.0
    %1112 = vmatprep.subr.mxu0 0.0
    %1113 = vmatpush1.msra.mxu0 0.0
    %1114 = vmatprep.subr.mxu0 0.0
    %1115 = vmatpush1.msra.mxu0 0.0
    %1116 = vmatprep.subr.mxu0 0.0
    %1117 = vmatpush1.msra.mxu0 0.0
    %1118 = vmatprep.subr.mxu0 0.0
    %1119 = vmatpush1.msra.mxu0 0.0
    %1120 = vmatprep.subr.mxu0 0.0
    %1121 = vmatpush1.msra.mxu0 0.0
    %1122 = vmatprep.subr.mxu0 0.0
    %1123 = vmatpush1.msra.mxu0 0.0
    %1124 = vmatprep.subr.mxu0 0.0
    %1125 = vmatpush1.msra.mxu0 0.0
    %1126 = vmatprep.subr.mxu0 0.0
    %1127 = vmatpush1.msra.mxu0 0.0
    %1128 = vmatprep.subr.mxu0 0.0
    %1129 = vmatpush1.msra.mxu0 0.0
    %1130 = vmatprep.subr.mxu0 0.0
    %1131 = vmatpush1.msra.mxu0 0.0
    %1132 = vmatprep.subr.mxu0 0.0
    %1133 = vmatpush1.msra.mxu0 0.0
    %1134 = vmatprep.subr.mxu0 0.0
    %1135 = vmatpush1.msra.mxu0 0.0
    %1136 = vmatprep.subr.mxu0 0.0
    %1137 = vmatpush1.msra.mxu0 0.0
    %1138 = vmatprep.subr.mxu0 0.0
    %1139 = vmatpush1.msra.mxu0 0.0
    %1140 = vmatprep.subr.mxu0 0.0
    %1141 = vmatpush1.msra.mxu0 0.0
    %1142 = vmatprep.subr.mxu0 0.0
    %1143 = vmatpush1.msra.mxu0 0.0
    %1144 = vmatprep.subr.mxu0 0.0
    %1145 = vmatpush1.msra.mxu0 0.0
    %1146 = vmatprep.subr.mxu0 0.0
    %1147 = vmatpush1.msra.mxu0 0.0
    %1148 = vmatprep.subr.mxu0 0.0
    %1149 = vmatpush1.msra.mxu0 0.0
    %1150 = vmatprep.subr.mxu0 0.0
    %1151 = vmatpush1.msra.mxu0 0.0
    %1152 = vmatprep.subr.mxu0 0.0
    %1153 = vmatpush1.msra.mxu0 0.0
    %1154 = vmatprep.subr.mxu0 0.0
    %1155 = vmatpush1.msra.mxu0 0.0
    %1156 = vmatprep.subr.mxu0 0.0
    %1157 = vmatpush1.msra.mxu0 0.0
    %1158 = vmatprep.subr.mxu0 0.0
    %1159 = vmatpush1.msra.mxu0 0.0
    %1160 = vmatprep.mubr.f32.mxu0 0.0
    %v1161 = vand.u32 %v753, 4294901760
    %1162 = vmatmul.mubr.f32.gmra.mrb[0].mxu0 %v1161
    %v1163 = vpop.f32.mrb[0].mxu0
    %v1164 = vadd.f32 %v1082, %v1163
    %v1165 = vpop.f32.mrb[0].mxu0
    %1166 = vmatprep.mubr.f32.mxu0 0.0
    %v1167 = vand.u32 %v756, 4294901760
    %1168 = vmatmul.mubr.f32.gmra.mrb[0].mxu0 %v1167
    %v1169 = vpop.f32.mrb[0].mxu0
    %v1170 = vadd.f32 %v1090, %v1169
    %v1171 = vpop.f32.mrb[0].mxu0
    %1172 = vdwg.mxu0
    %1173 = vmatprep.subr.mxu0 0.0
    %v1174 = vand.u32 %v760, 4294901760
    %1175 = vmatpush1.msra.mxu0 %v1174
    %1176 = vmatprep.subr.mxu0 0.0
    %1177 = vmatpush1.msra.mxu0 0.0
    %1178 = vmatprep.subr.mxu0 0.0
    %1179 = vmatpush1.msra.mxu0 0.0
    %1180 = vmatprep.subr.mxu0 0.0
    %1181 = vmatpush1.msra.mxu0 0.0
    %1182 = vmatprep.subr.mxu0 0.0
    %1183 = vmatpush1.msra.mxu0 0.0
    %1184 = vmatprep.subr.mxu0 0.0
    %1185 = vmatpush1.msra.mxu0 0.0
    %1186 = vmatprep.subr.mxu0 0.0
    %1187 = vmatpush1.msra.mxu0 0.0
    %1188 = vmatprep.subr.mxu0 0.0
    %1189 = vmatpush1.msra.mxu0 0.0
    %1190 = vmatprep.subr.mxu0 0.0
    %1191 = vmatpush1.msra.mxu0 0.0
    %1192 = vmatprep.subr.mxu0 0.0
    %1193 = vmatpush1.msra.mxu0 0.0
    %1194 = vmatprep.subr.mxu0 0.0
    %1195 = vmatpush1.msra.mxu0 0.0
    %1196 = vmatprep.subr.mxu0 0.0
    %1197 = vmatpush1.msra.mxu0 0.0
    %1198 = vmatprep.subr.mxu0 0.0
    %1199 = vmatpush1.msra.mxu0 0.0
    %1200 = vmatprep.subr.mxu0 0.0
    %1201 = vmatpush1.msra.mxu0 0.0
    %1202 = vmatprep.subr.mxu0 0.0
    %1203 = vmatpush1.msra.mxu0 0.0
    %1204 = vmatprep.subr.mxu0 0.0
    %1205 = vmatpush1.msra.mxu0 0.0
    %1206 = vmatprep.subr.mxu0 0.0
    %1207 = vmatpush1.msra.mxu0 0.0
    %1208 = vmatprep.subr.mxu0 0.0
    %1209 = vmatpush1.msra.mxu0 0.0
    %1210 = vmatprep.subr.mxu0 0.0
    %1211 = vmatpush1.msra.mxu0 0.0
    %1212 = vmatprep.subr.mxu0 0.0
    %1213 = vmatpush1.msra.mxu0 0.0
    %1214 = vmatprep.subr.mxu0 0.0
    %1215 = vmatpush1.msra.mxu0 0.0
    %1216 = vmatprep.subr.mxu0 0.0
    %1217 = vmatpush1.msra.mxu0 0.0
    %1218 = vmatprep.subr.mxu0 0.0
    %1219 = vmatpush1.msra.mxu0 0.0
    %1220 = vmatprep.subr.mxu0 0.0
    %1221 = vmatpush1.msra.mxu0 0.0
    %1222 = vmatprep.subr.mxu0 0.0
    %1223 = vmatpush1.msra.mxu0 0.0
    %1224 = vmatprep.subr.mxu0 0.0
    %1225 = vmatpush1.msra.mxu0 0.0
    %1226 = vmatprep.subr.mxu0 0.0
    %1227 = vmatpush1.msra.mxu0 0.0
    %1228 = vmatprep.subr.mxu0 0.0
    %1229 = vmatpush1.msra.mxu0 0.0
    %1230 = vmatprep.subr.mxu0 0.0
    %1231 = vmatpush1.msra.mxu0 0.0
    %1232 = vmatprep.subr.mxu0 0.0
    %1233 = vmatpush1.msra.mxu0 0.0
    %1234 = vmatprep.subr.mxu0 0.0
    %1235 = vmatpush1.msra.mxu0 0.0
    %1236 = vmatprep.subr.mxu0 0.0
    %1237 = vmatpush1.msra.mxu0 0.0
    %1238 = vmatprep.mubr.f32.mxu0 0.0
    %v1239 = vand.u32 %v753, 4294901760
    %1240 = vmatmul.mubr.f32.gmra.mrb[0].mxu0 %v1239
    %v1241 = vpop.f32.mrb[0].mxu0
    %v1242 = vadd.f32 %v1164, %v1241
    %v1243 = vpop.f32.mrb[0].mxu0
    %1244 = vmatprep.mubr.f32.mxu0 0.0
    %v1245 = vand.u32 %v756, 4294901760
    %1246 = vmatmul.mubr.f32.gmra.mrb[0].mxu0 %v1245
    %v1247 = vpop.f32.mrb[0].mxu0
    %v1248 = vadd.f32 %v1170, %v1247
    %v1249 = vpop.f32.mrb[0].mxu0
    %1250 = vdwg.mxu0
    %v1251 = vld [vmem:[#allocation2] sm:$0xff]
    %v1252 = vld [vmem:[#allocation2 + $0x8] sm:$0xff]
    %v1253 = vadd.f32 %v1251, %v726
    %v1254 = vadd.f32 %v1252, %v732
    %v1255 = vadd.f32 %v1253, %v1242
    %v1256 = vadd.f32 %v1254, %v1248
    %1257 = vst [vmem:[%s5] sm:$0xff] %v1255
    %1258 = vst [vmem:[%s5 + $0x8] sm:$0xff] %v1256
  $region33: #{lora_linear_forward.1} parent=0 // pred_fallthru
    _
  // Predicated region
  $region34: #{lora_linear_forward.1} parent=0 // pred_check
    _
  $region35: #{lora_linear_forward.1} parent=0 // pred_check_branch
    %1260 = sbr.rel (0) target = $region37
  $region36: #{lora_linear_forward.1} parent=0 // pred_region
    _
  $region37: #{lora_linear_forward.1} parent=0 // pred_fallthru
    _
  // Predicated region
  $region38: #{lora_linear_forward.1} parent=0 // pred_check
    _
  $region39: #{lora_linear_forward.1} parent=0 // pred_check_branch
    %1262 = sbr.rel (0) target = $region41
  $region40: #{lora_linear_forward.1} parent=0 // pred_region
    _
  $region41: #{lora_linear_forward.1} parent=0 // pred_fallthru
    _

</llo_original>
